<compile_context>
chip_gen: v6e
topology: v6e:2x2x1
jax: 0.10.0
libtpu: 0.0.40
codegen_flags: <defaults>
</compile_context>

<pallas_src>
import functools

import jax
import jax.numpy as jnp
import numpy as np
from jax.experimental import pallas as pl
from jax.experimental.pallas import tpu as pltpu

EPS = 1e-5


def dpcb_d2_kernel(x_ref, w0_ref, wt_ref, mask_ref, gamma_ref, beta_ref,
                   o_ref, *, offsets, W, tap_dtype):
    # x_ref:     (N, Cin, H*W)   channels-first, spatial flattened (lane dim)
    # w0_ref:    (Cin, Cout, 1)  1x1 conv weight as per-Cin (Cout,1) columns
    # wt_ref:    (T, N*Cout, 1)  merged depthwise tap weights, pre-tiled
    # mask_ref:  (T, 1, H*W)     precomputed {0,1} boundary masks per tap
    # gamma_ref: (1, Cout, 1)    BN scale
    # beta_ref:  (1, Cout, 1)    BN shift
    # o_ref:     (N, Cout, H*W)
    N, Cin, HW = x_ref.shape
    Cout = o_ref.shape[1]

    # ---- 1x1 conv: Cin unrolled broadcast-FMAs on the VPU ----
    x = x_ref[...]
    y = x[:, 0:1, :] * w0_ref[0]
    for ci in range(1, Cin):
        y = y + x[:, ci:ci + 1, :] * w0_ref[ci]
    # Flat (N*Cout, HW): leading-dims merge only (layout preserving).
    y = y.reshape(N * Cout, HW).astype(tap_dtype)

    # ---- merged depthwise 3x3(dil=1) + 3x3(dil=2): roll + mask + FMA taps ----
    # Two partial accumulators (f32) break the serial add dependence chain so
    # the scheduler can fill the VALU slots with independent taps.
    acc = [None, None]
    for k, (dh, dw) in enumerate(offsets):
        wt = wt_ref[k]                               # (N*Cout, 1)
        if dh == 0 and dw == 0:                      # centre tap: no shift/mask
            p = y * wt
        else:
            s = dh * W + dw                          # flat source offset
            shifted = pltpu.roll(y, (-s) % HW, axis=1)
            p = shifted * mask_ref[k] * wt           # mask_ref[k]: (1, HW)
        slot = k & 1
        if acc[slot] is None:
            acc[slot] = p.astype(jnp.float32)        # f32 accumulation
        else:
            acc[slot] = acc[slot] + p
    d = acc[0] if acc[1] is None else acc[0] + acc[1]
    d = d.reshape(N, Cout, HW)                       # single reshape before BN

    # ---- BatchNorm2d: training-mode batch stats over (N, H, W) ----
    cnt = jnp.float32(N * HW)
    mean = jnp.sum(jnp.sum(d, axis=2, keepdims=True), axis=0,
                   keepdims=True) / cnt              # (1, Cout, 1)
    c = d - mean
    var = jnp.sum(jnp.sum(c * c, axis=2, keepdims=True), axis=0,
                  keepdims=True) / cnt               # centered (robust) variance
    scale = gamma_ref[...] * jax.lax.rsqrt(var + EPS)
    o_ref[...] = (c * scale + beta_ref[...]).astype(o_ref.dtype)


def dilated_parallel_conv_block_d2(x_nchw, w0, w1, w2, gamma, beta,
                                   tap_dtype=jnp.float32):
    """x_nchw: (N, Cin, H, W) f32.
    w0: (Cin, Cout)      1x1 conv weight (PyTorch (Cout,Cin,1,1) transposed).
    w1, w2: (9, Cout)    depthwise 3x3 taps, k = ky*3 + kx, dilation 1 / 2.
    gamma, beta: (Cout,) BatchNorm2d affine parameters.
    tap_dtype: dtype for the roll/mask/FMA tap loop.  Keep f32 on v5e; on
    bf16-native v6e/v7x jnp.bfloat16 halves XLU/VALU traffic (accumulation
    and BN statistics remain f32 regardless).
    Returns (N, Cout, H, W)."""
    N, Cin, H, W = x_nchw.shape
    Cout = w0.shape[1]
    HW = H * W

    # Merge the dil-1 and dil-2 depthwise kernels into unique-offset taps
    # (shared centre tap pre-summed).  Centre first so it seeds an accumulator
    # without a zeros-init.
    taps = {}
    for dil, w in ((1, w1), (2, w2)):
        for ky in range(3):
            for kx in range(3):
                off = (dil * (ky - 1), dil * (kx - 1))
                wk = w[ky * 3 + kx]
                taps[off] = wk if off not in taps else taps[off] + wk
    offsets = ((0, 0),) + tuple(o for o in taps if o != (0, 0))   # 17 offsets
    T = len(offsets)
    wt = jnp.stack([taps[o] for o in offsets])                    # (T, Cout)
    # Pre-tile per-channel tap weights to the flattened (N*Cout, 1) layout.
    wt_flat = jnp.tile(wt[:, None, :], (1, N, 1)).reshape(T, N * Cout, 1)
    wt_flat = wt_flat.astype(tap_dtype)

    # Hoisted per-tap boundary masks, built on the host (static constants).
    # Correctness invariant of the flat-HW roll trick: the mask is exact in
    # (h, w) for every output position, so any lane where the circular roll
    # wraps (row crossing from column overflow, or whole-array wrap) is
    # multiplied by 0; this holds for any H, W and |offset| <= 2.
    hh = np.arange(HW, dtype=np.int64) // W
    ww = np.arange(HW, dtype=np.int64) % W
    masks = np.stack([
        ((hh + dh >= 0) & (hh + dh < H) & (ww + dw >= 0) & (ww + dw < W))
        for (dh, dw) in offsets]).astype(np.float32)              # (T, HW)
    masks = jnp.asarray(masks.reshape(T, 1, HW), dtype=tap_dtype)

    kernel = functools.partial(dpcb_d2_kernel, offsets=offsets, W=W,
                               tap_dtype=tap_dtype)
    vmem = pl.BlockSpec(memory_space=pltpu.MemorySpace.VMEM)
    out = pl.pallas_call(
        kernel,
        out_shape=jax.ShapeDtypeStruct((N, Cout, HW), x_nchw.dtype),
        in_specs=[vmem] * 6,
        out_specs=vmem,
    )(x_nchw.reshape(N, Cin, HW),
      w0.reshape(Cin, Cout, 1),
      wt_flat,
      masks,
      gamma.reshape(1, Cout, 1),
      beta.reshape(1, Cout, 1))
    return out.reshape(N, Cout, H, W)


def ref_forward(x, w0, w1, w2, gamma, beta):
    """Pure-JAX reference (NCHW), matching the PyTorch forward."""
    Cin, Cout = w0.shape
    hi = jax.lax.Precision.HIGHEST
    dn = ("NCHW", "OIHW", "NCHW")
    w0_oihw = w0.T.reshape(Cout, Cin, 1, 1)
    y = jax.lax.conv_general_dilated(x, w0_oihw, (1, 1), "VALID",
                                     dimension_numbers=dn, precision=hi)
    w1_oihw = w1.T.reshape(Cout, 1, 3, 3)
    d1 = jax.lax.conv_general_dilated(y, w1_oihw, (1, 1), [(1, 1), (1, 1)],
                                      rhs_dilation=(1, 1), dimension_numbers=dn,
                                      feature_group_count=Cout, precision=hi)
    w2_oihw = w2.T.reshape(Cout, 1, 3, 3)
    d2 = jax.lax.conv_general_dilated(y, w2_oihw, (1, 1), [(2, 2), (2, 2)],
                                      rhs_dilation=(2, 2), dimension_numbers=dn,
                                      feature_group_count=Cout, precision=hi)
    d = d1 + d2
    mean = jnp.mean(d, axis=(0, 2, 3), keepdims=True)
    var = jnp.mean(jnp.square(d - mean), axis=(0, 2, 3), keepdims=True)
    g = gamma.reshape(1, Cout, 1, 1)
    b = beta.reshape(1, Cout, 1, 1)
    return (d - mean) * jax.lax.rsqrt(var + EPS) * g + b


if __name__ == "__main__":
    N, Cin, Cout, H, W = 2, 4, 8, 16, 16

    key = jax.random.PRNGKey(0)
    kx, k0, k1, k2, kg, kb = jax.random.split(key, 6)

    x = jax.random.normal(kx, (N, Cin, H, W), dtype=jnp.float32)
    # conv0: nn.Conv2d(in, out, 1, bias=False) stored as (Cin, Cout)
    w0 = jax.random.normal(k0, (Cin, Cout), dtype=jnp.float32) * 0.3
    # conv1/conv2: depthwise 3x3 (out,1,3,3) stored as (9, Cout), k = ky*3+kx
    w1 = jax.random.normal(k1, (9, Cout), dtype=jnp.float32) * 0.3
    w2 = jax.random.normal(k2, (9, Cout), dtype=jnp.float32) * 0.3
    # BatchNorm2d affine parameters
    gamma = 1.0 + 0.1 * jax.random.normal(kg, (Cout,), dtype=jnp.float32)
    beta = 0.1 * jax.random.normal(kb, (Cout,), dtype=jnp.float32)

    out = dilated_parallel_conv_block_d2(x, w0, w1, w2, gamma, beta)
    out = jax.block_until_ready(out)

    ref = jax.block_until_ready(ref_forward(x, w0, w1, w2, gamma, beta))
    assert out.shape == (N, Cout, H, W)
    assert jnp.allclose(out, ref, rtol=1e-3, atol=1e-3), (
        float(jnp.max(jnp.abs(out - ref))))

    print("KERNEL_OK")
</pallas_src>

<mosaic_0001>
module attributes {stable_mosaic.version = 11 : i64} {
  func.func @dpcb_d2_kernel(%arg0: memref<2x4x256xf32, #tpu.memory_space<vmem>>, %arg1: memref<4x8x1xf32, #tpu.memory_space<vmem>>, %arg2: memref<17x16x1xf32, #tpu.memory_space<vmem>>, %arg3: memref<17x1x256xf32, #tpu.memory_space<vmem>>, %arg4: memref<1x8x1xf32, #tpu.memory_space<vmem>>, %arg5: memref<1x8x1xf32, #tpu.memory_space<vmem>>, %arg6: memref<2x8x256xf32, #tpu.memory_space<vmem>>) attributes {dimension_semantics = [], scalar_prefetch = 0 : i64, scratch_operands = 0 : i64, tpu.core_type = #tpu.core_type<tc>} {
    %c0 = arith.constant 0 : index
    %c0_0 = arith.constant 0 : index
    %c0_1 = arith.constant 0 : index
    %0 = vector.load %arg0[%c0, %c0_0, %c0_1] : memref<2x4x256xf32, #tpu.memory_space<vmem>>, vector<2x4x256xf32>
    %1 = vector.extract_strided_slice %0 {offsets = [0, 0, 0], sizes = [2, 1, 256], strides = [1, 1, 1]} : vector<2x4x256xf32> to vector<2x1x256xf32>
    %c0_2 = arith.constant 0 : index
    %c0_3 = arith.constant 0 : index
    %c0_4 = arith.constant 0 : index
    %2 = vector.load %arg1[%c0_2, %c0_3, %c0_4] : memref<4x8x1xf32, #tpu.memory_space<vmem>>, vector<1x8x1xf32>
    %3 = vector.shape_cast %2 : vector<1x8x1xf32> to vector<8x1xf32>
    %4 = vector.shape_cast %3 : vector<8x1xf32> to vector<1x8x1xf32>
    %5 = vector.broadcast %1 : vector<2x1x256xf32> to vector<2x8x256xf32>
    %6 = vector.broadcast %4 : vector<1x8x1xf32> to vector<2x8x256xf32>
    %7 = arith.mulf %5, %6 : vector<2x8x256xf32>
    %8 = vector.extract_strided_slice %0 {offsets = [0, 1, 0], sizes = [2, 1, 256], strides = [1, 1, 1]} : vector<2x4x256xf32> to vector<2x1x256xf32>
    %c1 = arith.constant 1 : index
    %c0_5 = arith.constant 0 : index
    %c0_6 = arith.constant 0 : index
    %9 = vector.load %arg1[%c1, %c0_5, %c0_6] : memref<4x8x1xf32, #tpu.memory_space<vmem>>, vector<1x8x1xf32>
    %10 = vector.shape_cast %9 : vector<1x8x1xf32> to vector<8x1xf32>
    %11 = vector.shape_cast %10 : vector<8x1xf32> to vector<1x8x1xf32>
    %12 = vector.broadcast %8 : vector<2x1x256xf32> to vector<2x8x256xf32>
    %13 = vector.broadcast %11 : vector<1x8x1xf32> to vector<2x8x256xf32>
    %14 = arith.mulf %12, %13 : vector<2x8x256xf32>
    %15 = arith.addf %7, %14 : vector<2x8x256xf32>
    %16 = vector.extract_strided_slice %0 {offsets = [0, 2, 0], sizes = [2, 1, 256], strides = [1, 1, 1]} : vector<2x4x256xf32> to vector<2x1x256xf32>
    %c2 = arith.constant 2 : index
    %c0_7 = arith.constant 0 : index
    %c0_8 = arith.constant 0 : index
    %17 = vector.load %arg1[%c2, %c0_7, %c0_8] : memref<4x8x1xf32, #tpu.memory_space<vmem>>, vector<1x8x1xf32>
    %18 = vector.shape_cast %17 : vector<1x8x1xf32> to vector<8x1xf32>
    %19 = vector.shape_cast %18 : vector<8x1xf32> to vector<1x8x1xf32>
    %20 = vector.broadcast %16 : vector<2x1x256xf32> to vector<2x8x256xf32>
    %21 = vector.broadcast %19 : vector<1x8x1xf32> to vector<2x8x256xf32>
    %22 = arith.mulf %20, %21 : vector<2x8x256xf32>
    %23 = arith.addf %15, %22 : vector<2x8x256xf32>
    %24 = vector.extract_strided_slice %0 {offsets = [0, 3, 0], sizes = [2, 1, 256], strides = [1, 1, 1]} : vector<2x4x256xf32> to vector<2x1x256xf32>
    %c3 = arith.constant 3 : index
    %c0_9 = arith.constant 0 : index
    %c0_10 = arith.constant 0 : index
    %25 = vector.load %arg1[%c3, %c0_9, %c0_10] : memref<4x8x1xf32, #tpu.memory_space<vmem>>, vector<1x8x1xf32>
    %26 = vector.shape_cast %25 : vector<1x8x1xf32> to vector<8x1xf32>
    %27 = vector.shape_cast %26 : vector<8x1xf32> to vector<1x8x1xf32>
    %28 = vector.broadcast %24 : vector<2x1x256xf32> to vector<2x8x256xf32>
    %29 = vector.broadcast %27 : vector<1x8x1xf32> to vector<2x8x256xf32>
    %30 = arith.mulf %28, %29 : vector<2x8x256xf32>
    %31 = arith.addf %23, %30 : vector<2x8x256xf32>
    %32 = vector.shape_cast %31 : vector<2x8x256xf32> to vector<16x256xf32>
    %c0_11 = arith.constant 0 : index
    %c0_12 = arith.constant 0 : index
    %c0_13 = arith.constant 0 : index
    %33 = vector.load %arg2[%c0_11, %c0_12, %c0_13] : memref<17x16x1xf32, #tpu.memory_space<vmem>>, vector<1x16x1xf32>
    %34 = vector.shape_cast %33 : vector<1x16x1xf32> to vector<16x1xf32>
    %35 = vector.broadcast %34 : vector<16x1xf32> to vector<16x256xf32>
    %36 = arith.mulf %32, %35 : vector<16x256xf32>
    %c1_14 = arith.constant 1 : index
    %c0_15 = arith.constant 0 : index
    %c0_16 = arith.constant 0 : index
    %37 = vector.load %arg2[%c1_14, %c0_15, %c0_16] : memref<17x16x1xf32, #tpu.memory_space<vmem>>, vector<1x16x1xf32>
    %38 = vector.shape_cast %37 : vector<1x16x1xf32> to vector<16x1xf32>
    %c17_i32 = arith.constant 17 : i32
    %39 = tpu.dynamic_rotate %32 by %c17_i32 dim 1 : vector<16x256xf32>, i32 -> vector<16x256xf32>
    %c1_17 = arith.constant 1 : index
    %c0_18 = arith.constant 0 : index
    %c0_19 = arith.constant 0 : index
    %40 = vector.load %arg3[%c1_17, %c0_18, %c0_19] : memref<17x1x256xf32, #tpu.memory_space<vmem>>, vector<1x1x256xf32>
    %41 = vector.shape_cast %40 : vector<1x1x256xf32> to vector<1x256xf32>
    %42 = vector.broadcast %41 : vector<1x256xf32> to vector<16x256xf32>
    %43 = arith.mulf %39, %42 : vector<16x256xf32>
    %44 = vector.broadcast %38 : vector<16x1xf32> to vector<16x256xf32>
    %45 = arith.mulf %43, %44 : vector<16x256xf32>
    %c2_20 = arith.constant 2 : index
    %c0_21 = arith.constant 0 : index
    %c0_22 = arith.constant 0 : index
    %46 = vector.load %arg2[%c2_20, %c0_21, %c0_22] : memref<17x16x1xf32, #tpu.memory_space<vmem>>, vector<1x16x1xf32>
    %47 = vector.shape_cast %46 : vector<1x16x1xf32> to vector<16x1xf32>
    %c16_i32 = arith.constant 16 : i32
    %48 = tpu.dynamic_rotate %32 by %c16_i32 dim 1 : vector<16x256xf32>, i32 -> vector<16x256xf32>
    %c2_23 = arith.constant 2 : index
    %c0_24 = arith.constant 0 : index
    %c0_25 = arith.constant 0 : index
    %49 = vector.load %arg3[%c2_23, %c0_24, %c0_25] : memref<17x1x256xf32, #tpu.memory_space<vmem>>, vector<1x1x256xf32>
    %50 = vector.shape_cast %49 : vector<1x1x256xf32> to vector<1x256xf32>
    %51 = vector.broadcast %50 : vector<1x256xf32> to vector<16x256xf32>
    %52 = arith.mulf %48, %51 : vector<16x256xf32>
    %53 = vector.broadcast %47 : vector<16x1xf32> to vector<16x256xf32>
    %54 = arith.mulf %52, %53 : vector<16x256xf32>
    %55 = arith.addf %36, %54 : vector<16x256xf32>
    %c3_26 = arith.constant 3 : index
    %c0_27 = arith.constant 0 : index
    %c0_28 = arith.constant 0 : index
    %56 = vector.load %arg2[%c3_26, %c0_27, %c0_28] : memref<17x16x1xf32, #tpu.memory_space<vmem>>, vector<1x16x1xf32>
    %57 = vector.shape_cast %56 : vector<1x16x1xf32> to vector<16x1xf32>
    %c15_i32 = arith.constant 15 : i32
    %58 = tpu.dynamic_rotate %32 by %c15_i32 dim 1 : vector<16x256xf32>, i32 -> vector<16x256xf32>
    %c3_29 = arith.constant 3 : index
    %c0_30 = arith.constant 0 : index
    %c0_31 = arith.constant 0 : index
    %59 = vector.load %arg3[%c3_29, %c0_30, %c0_31] : memref<17x1x256xf32, #tpu.memory_space<vmem>>, vector<1x1x256xf32>
    %60 = vector.shape_cast %59 : vector<1x1x256xf32> to vector<1x256xf32>
    %61 = vector.broadcast %60 : vector<1x256xf32> to vector<16x256xf32>
    %62 = arith.mulf %58, %61 : vector<16x256xf32>
    %63 = vector.broadcast %57 : vector<16x1xf32> to vector<16x256xf32>
    %64 = arith.mulf %62, %63 : vector<16x256xf32>
    %65 = arith.addf %45, %64 : vector<16x256xf32>
    %c4 = arith.constant 4 : index
    %c0_32 = arith.constant 0 : index
    %c0_33 = arith.constant 0 : index
    %66 = vector.load %arg2[%c4, %c0_32, %c0_33] : memref<17x16x1xf32, #tpu.memory_space<vmem>>, vector<1x16x1xf32>
    %67 = vector.shape_cast %66 : vector<1x16x1xf32> to vector<16x1xf32>
    %c1_i32 = arith.constant 1 : i32
    %68 = tpu.dynamic_rotate %32 by %c1_i32 dim 1 : vector<16x256xf32>, i32 -> vector<16x256xf32>
    %c4_34 = arith.constant 4 : index
    %c0_35 = arith.constant 0 : index
    %c0_36 = arith.constant 0 : index
    %69 = vector.load %arg3[%c4_34, %c0_35, %c0_36] : memref<17x1x256xf32, #tpu.memory_space<vmem>>, vector<1x1x256xf32>
    %70 = vector.shape_cast %69 : vector<1x1x256xf32> to vector<1x256xf32>
    %71 = vector.broadcast %70 : vector<1x256xf32> to vector<16x256xf32>
    %72 = arith.mulf %68, %71 : vector<16x256xf32>
    %73 = vector.broadcast %67 : vector<16x1xf32> to vector<16x256xf32>
    %74 = arith.mulf %72, %73 : vector<16x256xf32>
    %75 = arith.addf %55, %74 : vector<16x256xf32>
    %c5 = arith.constant 5 : index
    %c0_37 = arith.constant 0 : index
    %c0_38 = arith.constant 0 : index
    %76 = vector.load %arg2[%c5, %c0_37, %c0_38] : memref<17x16x1xf32, #tpu.memory_space<vmem>>, vector<1x16x1xf32>
    %77 = vector.shape_cast %76 : vector<1x16x1xf32> to vector<16x1xf32>
    %c255_i32 = arith.constant 255 : i32
    %78 = tpu.dynamic_rotate %32 by %c255_i32 dim 1 : vector<16x256xf32>, i32 -> vector<16x256xf32>
    %c5_39 = arith.constant 5 : index
    %c0_40 = arith.constant 0 : index
    %c0_41 = arith.constant 0 : index
    %79 = vector.load %arg3[%c5_39, %c0_40, %c0_41] : memref<17x1x256xf32, #tpu.memory_space<vmem>>, vector<1x1x256xf32>
    %80 = vector.shape_cast %79 : vector<1x1x256xf32> to vector<1x256xf32>
    %81 = vector.broadcast %80 : vector<1x256xf32> to vector<16x256xf32>
    %82 = arith.mulf %78, %81 : vector<16x256xf32>
    %83 = vector.broadcast %77 : vector<16x1xf32> to vector<16x256xf32>
    %84 = arith.mulf %82, %83 : vector<16x256xf32>
    %85 = arith.addf %65, %84 : vector<16x256xf32>
    %c6 = arith.constant 6 : index
    %c0_42 = arith.constant 0 : index
    %c0_43 = arith.constant 0 : index
    %86 = vector.load %arg2[%c6, %c0_42, %c0_43] : memref<17x16x1xf32, #tpu.memory_space<vmem>>, vector<1x16x1xf32>
    %87 = vector.shape_cast %86 : vector<1x16x1xf32> to vector<16x1xf32>
    %c241_i32 = arith.constant 241 : i32
    %88 = tpu.dynamic_rotate %32 by %c241_i32 dim 1 : vector<16x256xf32>, i32 -> vector<16x256xf32>
    %c6_44 = arith.constant 6 : index
    %c0_45 = arith.constant 0 : index
    %c0_46 = arith.constant 0 : index
    %89 = vector.load %arg3[%c6_44, %c0_45, %c0_46] : memref<17x1x256xf32, #tpu.memory_space<vmem>>, vector<1x1x256xf32>
    %90 = vector.shape_cast %89 : vector<1x1x256xf32> to vector<1x256xf32>
    %91 = vector.broadcast %90 : vector<1x256xf32> to vector<16x256xf32>
    %92 = arith.mulf %88, %91 : vector<16x256xf32>
    %93 = vector.broadcast %87 : vector<16x1xf32> to vector<16x256xf32>
    %94 = arith.mulf %92, %93 : vector<16x256xf32>
    %95 = arith.addf %75, %94 : vector<16x256xf32>
    %c7 = arith.constant 7 : index
    %c0_47 = arith.constant 0 : index
    %c0_48 = arith.constant 0 : index
    %96 = vector.load %arg2[%c7, %c0_47, %c0_48] : memref<17x16x1xf32, #tpu.memory_space<vmem>>, vector<1x16x1xf32>
    %97 = vector.shape_cast %96 : vector<1x16x1xf32> to vector<16x1xf32>
    %c240_i32 = arith.constant 240 : i32
    %98 = tpu.dynamic_rotate %32 by %c240_i32 dim 1 : vector<16x256xf32>, i32 -> vector<16x256xf32>
    %c7_49 = arith.constant 7 : index
    %c0_50 = arith.constant 0 : index
    %c0_51 = arith.constant 0 : index
    %99 = vector.load %arg3[%c7_49, %c0_50, %c0_51] : memref<17x1x256xf32, #tpu.memory_space<vmem>>, vector<1x1x256xf32>
    %100 = vector.shape_cast %99 : vector<1x1x256xf32> to vector<1x256xf32>
    %101 = vector.broadcast %100 : vector<1x256xf32> to vector<16x256xf32>
    %102 = arith.mulf %98, %101 : vector<16x256xf32>
    %103 = vector.broadcast %97 : vector<16x1xf32> to vector<16x256xf32>
    %104 = arith.mulf %102, %103 : vector<16x256xf32>
    %105 = arith.addf %85, %104 : vector<16x256xf32>
    %c8 = arith.constant 8 : index
    %c0_52 = arith.constant 0 : index
    %c0_53 = arith.constant 0 : index
    %106 = vector.load %arg2[%c8, %c0_52, %c0_53] : memref<17x16x1xf32, #tpu.memory_space<vmem>>, vector<1x16x1xf32>
    %107 = vector.shape_cast %106 : vector<1x16x1xf32> to vector<16x1xf32>
    %c239_i32 = arith.constant 239 : i32
    %108 = tpu.dynamic_rotate %32 by %c239_i32 dim 1 : vector<16x256xf32>, i32 -> vector<16x256xf32>
    %c8_54 = arith.constant 8 : index
    %c0_55 = arith.constant 0 : index
    %c0_56 = arith.constant 0 : index
    %109 = vector.load %arg3[%c8_54, %c0_55, %c0_56] : memref<17x1x256xf32, #tpu.memory_space<vmem>>, vector<1x1x256xf32>
    %110 = vector.shape_cast %109 : vector<1x1x256xf32> to vector<1x256xf32>
    %111 = vector.broadcast %110 : vector<1x256xf32> to vector<16x256xf32>
    %112 = arith.mulf %108, %111 : vector<16x256xf32>
    %113 = vector.broadcast %107 : vector<16x1xf32> to vector<16x256xf32>
    %114 = arith.mulf %112, %113 : vector<16x256xf32>
    %115 = arith.addf %95, %114 : vector<16x256xf32>
    %c9 = arith.constant 9 : index
    %c0_57 = arith.constant 0 : index
    %c0_58 = arith.constant 0 : index
    %116 = vector.load %arg2[%c9, %c0_57, %c0_58] : memref<17x16x1xf32, #tpu.memory_space<vmem>>, vector<1x16x1xf32>
    %117 = vector.shape_cast %116 : vector<1x16x1xf32> to vector<16x1xf32>
    %c34_i32 = arith.constant 34 : i32
    %118 = tpu.dynamic_rotate %32 by %c34_i32 dim 1 : vector<16x256xf32>, i32 -> vector<16x256xf32>
    %c9_59 = arith.constant 9 : index
    %c0_60 = arith.constant 0 : index
    %c0_61 = arith.constant 0 : index
    %119 = vector.load %arg3[%c9_59, %c0_60, %c0_61] : memref<17x1x256xf32, #tpu.memory_space<vmem>>, vector<1x1x256xf32>
    %120 = vector.shape_cast %119 : vector<1x1x256xf32> to vector<1x256xf32>
    %121 = vector.broadcast %120 : vector<1x256xf32> to vector<16x256xf32>
    %122 = arith.mulf %118, %121 : vector<16x256xf32>
    %123 = vector.broadcast %117 : vector<16x1xf32> to vector<16x256xf32>
    %124 = arith.mulf %122, %123 : vector<16x256xf32>
    %125 = arith.addf %105, %124 : vector<16x256xf32>
    %c10 = arith.constant 10 : index
    %c0_62 = arith.constant 0 : index
    %c0_63 = arith.constant 0 : index
    %126 = vector.load %arg2[%c10, %c0_62, %c0_63] : memref<17x16x1xf32, #tpu.memory_space<vmem>>, vector<1x16x1xf32>
    %127 = vector.shape_cast %126 : vector<1x16x1xf32> to vector<16x1xf32>
    %c32_i32 = arith.constant 32 : i32
    %128 = tpu.dynamic_rotate %32 by %c32_i32 dim 1 : vector<16x256xf32>, i32 -> vector<16x256xf32>
    %c10_64 = arith.constant 10 : index
    %c0_65 = arith.constant 0 : index
    %c0_66 = arith.constant 0 : index
    %129 = vector.load %arg3[%c10_64, %c0_65, %c0_66] : memref<17x1x256xf32, #tpu.memory_space<vmem>>, vector<1x1x256xf32>
    %130 = vector.shape_cast %129 : vector<1x1x256xf32> to vector<1x256xf32>
    %131 = vector.broadcast %130 : vector<1x256xf32> to vector<16x256xf32>
    %132 = arith.mulf %128, %131 : vector<16x256xf32>
    %133 = vector.broadcast %127 : vector<16x1xf32> to vector<16x256xf32>
    %134 = arith.mulf %132, %133 : vector<16x256xf32>
    %135 = arith.addf %115, %134 : vector<16x256xf32>
    %c11 = arith.constant 11 : index
    %c0_67 = arith.constant 0 : index
    %c0_68 = arith.constant 0 : index
    %136 = vector.load %arg2[%c11, %c0_67, %c0_68] : memref<17x16x1xf32, #tpu.memory_space<vmem>>, vector<1x16x1xf32>
    %137 = vector.shape_cast %136 : vector<1x16x1xf32> to vector<16x1xf32>
    %c30_i32 = arith.constant 30 : i32
    %138 = tpu.dynamic_rotate %32 by %c30_i32 dim 1 : vector<16x256xf32>, i32 -> vector<16x256xf32>
    %c11_69 = arith.constant 11 : index
    %c0_70 = arith.constant 0 : index
    %c0_71 = arith.constant 0 : index
    %139 = vector.load %arg3[%c11_69, %c0_70, %c0_71] : memref<17x1x256xf32, #tpu.memory_space<vmem>>, vector<1x1x256xf32>
    %140 = vector.shape_cast %139 : vector<1x1x256xf32> to vector<1x256xf32>
    %141 = vector.broadcast %140 : vector<1x256xf32> to vector<16x256xf32>
    %142 = arith.mulf %138, %141 : vector<16x256xf32>
    %143 = vector.broadcast %137 : vector<16x1xf32> to vector<16x256xf32>
    %144 = arith.mulf %142, %143 : vector<16x256xf32>
    %145 = arith.addf %125, %144 : vector<16x256xf32>
    %c12 = arith.constant 12 : index
    %c0_72 = arith.constant 0 : index
    %c0_73 = arith.constant 0 : index
    %146 = vector.load %arg2[%c12, %c0_72, %c0_73] : memref<17x16x1xf32, #tpu.memory_space<vmem>>, vector<1x16x1xf32>
    %147 = vector.shape_cast %146 : vector<1x16x1xf32> to vector<16x1xf32>
    %c2_i32 = arith.constant 2 : i32
    %148 = tpu.dynamic_rotate %32 by %c2_i32 dim 1 : vector<16x256xf32>, i32 -> vector<16x256xf32>
    %c12_74 = arith.constant 12 : index
    %c0_75 = arith.constant 0 : index
    %c0_76 = arith.constant 0 : index
    %149 = vector.load %arg3[%c12_74, %c0_75, %c0_76] : memref<17x1x256xf32, #tpu.memory_space<vmem>>, vector<1x1x256xf32>
    %150 = vector.shape_cast %149 : vector<1x1x256xf32> to vector<1x256xf32>
    %151 = vector.broadcast %150 : vector<1x256xf32> to vector<16x256xf32>
    %152 = arith.mulf %148, %151 : vector<16x256xf32>
    %153 = vector.broadcast %147 : vector<16x1xf32> to vector<16x256xf32>
    %154 = arith.mulf %152, %153 : vector<16x256xf32>
    %155 = arith.addf %135, %154 : vector<16x256xf32>
    %c13 = arith.constant 13 : index
    %c0_77 = arith.constant 0 : index
    %c0_78 = arith.constant 0 : index
    %156 = vector.load %arg2[%c13, %c0_77, %c0_78] : memref<17x16x1xf32, #tpu.memory_space<vmem>>, vector<1x16x1xf32>
    %157 = vector.shape_cast %156 : vector<1x16x1xf32> to vector<16x1xf32>
    %c254_i32 = arith.constant 254 : i32
    %158 = tpu.dynamic_rotate %32 by %c254_i32 dim 1 : vector<16x256xf32>, i32 -> vector<16x256xf32>
    %c13_79 = arith.constant 13 : index
    %c0_80 = arith.constant 0 : index
    %c0_81 = arith.constant 0 : index
    %159 = vector.load %arg3[%c13_79, %c0_80, %c0_81] : memref<17x1x256xf32, #tpu.memory_space<vmem>>, vector<1x1x256xf32>
    %160 = vector.shape_cast %159 : vector<1x1x256xf32> to vector<1x256xf32>
    %161 = vector.broadcast %160 : vector<1x256xf32> to vector<16x256xf32>
    %162 = arith.mulf %158, %161 : vector<16x256xf32>
    %163 = vector.broadcast %157 : vector<16x1xf32> to vector<16x256xf32>
    %164 = arith.mulf %162, %163 : vector<16x256xf32>
    %165 = arith.addf %145, %164 : vector<16x256xf32>
    %c14 = arith.constant 14 : index
    %c0_82 = arith.constant 0 : index
    %c0_83 = arith.constant 0 : index
    %166 = vector.load %arg2[%c14, %c0_82, %c0_83] : memref<17x16x1xf32, #tpu.memory_space<vmem>>, vector<1x16x1xf32>
    %167 = vector.shape_cast %166 : vector<1x16x1xf32> to vector<16x1xf32>
    %c226_i32 = arith.constant 226 : i32
    %168 = tpu.dynamic_rotate %32 by %c226_i32 dim 1 : vector<16x256xf32>, i32 -> vector<16x256xf32>
    %c14_84 = arith.constant 14 : index
    %c0_85 = arith.constant 0 : index
    %c0_86 = arith.constant 0 : index
    %169 = vector.load %arg3[%c14_84, %c0_85, %c0_86] : memref<17x1x256xf32, #tpu.memory_space<vmem>>, vector<1x1x256xf32>
    %170 = vector.shape_cast %169 : vector<1x1x256xf32> to vector<1x256xf32>
    %171 = vector.broadcast %170 : vector<1x256xf32> to vector<16x256xf32>
    %172 = arith.mulf %168, %171 : vector<16x256xf32>
    %173 = vector.broadcast %167 : vector<16x1xf32> to vector<16x256xf32>
    %174 = arith.mulf %172, %173 : vector<16x256xf32>
    %175 = arith.addf %155, %174 : vector<16x256xf32>
    %c15 = arith.constant 15 : index
    %c0_87 = arith.constant 0 : index
    %c0_88 = arith.constant 0 : index
    %176 = vector.load %arg2[%c15, %c0_87, %c0_88] : memref<17x16x1xf32, #tpu.memory_space<vmem>>, vector<1x16x1xf32>
    %177 = vector.shape_cast %176 : vector<1x16x1xf32> to vector<16x1xf32>
    %c224_i32 = arith.constant 224 : i32
    %178 = tpu.dynamic_rotate %32 by %c224_i32 dim 1 : vector<16x256xf32>, i32 -> vector<16x256xf32>
    %c15_89 = arith.constant 15 : index
    %c0_90 = arith.constant 0 : index
    %c0_91 = arith.constant 0 : index
    %179 = vector.load %arg3[%c15_89, %c0_90, %c0_91] : memref<17x1x256xf32, #tpu.memory_space<vmem>>, vector<1x1x256xf32>
    %180 = vector.shape_cast %179 : vector<1x1x256xf32> to vector<1x256xf32>
    %181 = vector.broadcast %180 : vector<1x256xf32> to vector<16x256xf32>
    %182 = arith.mulf %178, %181 : vector<16x256xf32>
    %183 = vector.broadcast %177 : vector<16x1xf32> to vector<16x256xf32>
    %184 = arith.mulf %182, %183 : vector<16x256xf32>
    %185 = arith.addf %165, %184 : vector<16x256xf32>
    %c16 = arith.constant 16 : index
    %c0_92 = arith.constant 0 : index
    %c0_93 = arith.constant 0 : index
    %186 = vector.load %arg2[%c16, %c0_92, %c0_93] : memref<17x16x1xf32, #tpu.memory_space<vmem>>, vector<1x16x1xf32>
    %187 = vector.shape_cast %186 : vector<1x16x1xf32> to vector<16x1xf32>
    %c222_i32 = arith.constant 222 : i32
    %188 = tpu.dynamic_rotate %32 by %c222_i32 dim 1 : vector<16x256xf32>, i32 -> vector<16x256xf32>
    %c16_94 = arith.constant 16 : index
    %c0_95 = arith.constant 0 : index
    %c0_96 = arith.constant 0 : index
    %189 = vector.load %arg3[%c16_94, %c0_95, %c0_96] : memref<17x1x256xf32, #tpu.memory_space<vmem>>, vector<1x1x256xf32>
    %190 = vector.shape_cast %189 : vector<1x1x256xf32> to vector<1x256xf32>
    %191 = vector.broadcast %190 : vector<1x256xf32> to vector<16x256xf32>
    %192 = arith.mulf %188, %191 : vector<16x256xf32>
    %193 = vector.broadcast %187 : vector<16x1xf32> to vector<16x256xf32>
    %194 = arith.mulf %192, %193 : vector<16x256xf32>
    %195 = arith.addf %175, %194 : vector<16x256xf32>
    %196 = arith.addf %195, %185 : vector<16x256xf32>
    %197 = vector.shape_cast %196 : vector<16x256xf32> to vector<2x8x256xf32>
    %cst = arith.constant dense<0.000000e+00> : vector<2x8xf32>
    %198 = vector.multi_reduction <add>, %197, %cst [2] : vector<2x8x256xf32> to vector<2x8xf32>
    %199 = vector.shape_cast %198 : vector<2x8xf32> to vector<2x8x1xf32>
    %cst_97 = arith.constant dense<0.000000e+00> : vector<8x1xf32>
    %200 = vector.multi_reduction <add>, %199, %cst_97 [0] : vector<2x8x1xf32> to vector<8x1xf32>
    %201 = vector.shape_cast %200 : vector<8x1xf32> to vector<1x8x1xf32>
    %cst_98 = arith.constant 5.120000e+02 : f32
    %202 = vector.broadcast %cst_98 : f32 to vector<1x8x1xf32>
    %203 = arith.divf %201, %202 : vector<1x8x1xf32>
    %204 = vector.broadcast %203 : vector<1x8x1xf32> to vector<2x8x256xf32>
    %205 = arith.subf %197, %204 : vector<2x8x256xf32>
    %206 = arith.mulf %205, %205 : vector<2x8x256xf32>
    %cst_99 = arith.constant dense<0.000000e+00> : vector<2x8xf32>
    %207 = vector.multi_reduction <add>, %206, %cst_99 [2] : vector<2x8x256xf32> to vector<2x8xf32>
    %208 = vector.shape_cast %207 : vector<2x8xf32> to vector<2x8x1xf32>
    %cst_100 = arith.constant dense<0.000000e+00> : vector<8x1xf32>
    %209 = vector.multi_reduction <add>, %208, %cst_100 [0] : vector<2x8x1xf32> to vector<8x1xf32>
    %210 = vector.shape_cast %209 : vector<8x1xf32> to vector<1x8x1xf32>
    %cst_101 = arith.constant 5.120000e+02 : f32
    %211 = vector.broadcast %cst_101 : f32 to vector<1x8x1xf32>
    %212 = arith.divf %210, %211 : vector<1x8x1xf32>
    %c0_102 = arith.constant 0 : index
    %c0_103 = arith.constant 0 : index
    %c0_104 = arith.constant 0 : index
    %213 = vector.load %arg4[%c0_102, %c0_103, %c0_104] : memref<1x8x1xf32, #tpu.memory_space<vmem>>, vector<1x8x1xf32>
    %cst_105 = arith.constant 9.99999974E-6 : f32
    %214 = vector.broadcast %cst_105 : f32 to vector<1x8x1xf32>
    %215 = arith.addf %212, %214 : vector<1x8x1xf32>
    %216 = math.rsqrt %215 : vector<1x8x1xf32>
    %217 = arith.mulf %213, %216 : vector<1x8x1xf32>
    %218 = vector.broadcast %217 : vector<1x8x1xf32> to vector<2x8x256xf32>
    %219 = arith.mulf %205, %218 : vector<2x8x256xf32>
    %c0_106 = arith.constant 0 : index
    %c0_107 = arith.constant 0 : index
    %c0_108 = arith.constant 0 : index
    %220 = vector.load %arg5[%c0_106, %c0_107, %c0_108] : memref<1x8x1xf32, #tpu.memory_space<vmem>>, vector<1x8x1xf32>
    %221 = vector.broadcast %220 : vector<1x8x1xf32> to vector<2x8x256xf32>
    %222 = arith.addf %219, %221 : vector<2x8x256xf32>
    %c0_109 = arith.constant 0 : index
    %c0_110 = arith.constant 0 : index
    %c0_111 = arith.constant 0 : index
    %223 = vector.load %arg6[%c0_109, %c0_110, %c0_111] : memref<2x8x256xf32, #tpu.memory_space<vmem>>, vector<2x8x256xf32>
    tpu.vector_store %arg6[%c0_109, %c0_110, %c0_111], %222 {strides = array<i32>} : memref<2x8x256xf32, #tpu.memory_space<vmem>>, vector<2x8x256xf32>,
    return
  }
}

</mosaic_0001>

<llo_original>
// kernel: tpu_custom_call.1
$region0: #{tpu_custom_call.1}
  #allocation0 [shape = 'u32[]', space=smem, size = 0x4, offset = 0x4, fixed_abs, tag = 'smem constant byte address 0x4 - core index']
  #allocation1 [shape = 'u32[144,128]{1,0:T(1,128)}', space=vmem, size = 0x12000, scoped, tag = 'internal scratch']
  %s0 = inlined_call_operand.vmem [shape: f32[2,4,256], index: 0, kind: input, shape index: {}]
  %s1 = inlined_call_operand.vmem [shape: f32[4,8,1], index: 1, kind: input, shape index: {}]
  %s2 = inlined_call_operand.vmem [shape: f32[17,16,1], index: 2, kind: input, shape index: {}]
  %s3 = inlined_call_operand.vmem [shape: f32[17,1,256], index: 3, kind: input, shape index: {}]
  %s4 = inlined_call_operand.vmem [shape: f32[1,8,1], index: 4, kind: input, shape index: {}]
  %s5 = inlined_call_operand.vmem [shape: f32[1,8,1], index: 5, kind: input, shape index: {}]
  %s6 = inlined_call_operand.hbm [shape: f32[2,8,256], index: 6, kind: output, shape index: {}]
  %s7 = sld [smem:[#allocation0]]
  $region34: #{tpu_custom_call.1} parent=0
    _
  %s9 = ssub.s32 1, %s7
  %s10 = scalar_select 0, %s9, %s7
  $region1: #{tpu_custom_call.1} parent=0
    #allocation2 [shape = 'u8[16384]{0}', space=vmem, size = 0x4000, scoped, tag = 'output window, operand 0, single buffered']
    #allocation3 [shape = 's32[1]{0}', space=sflag, size = 0x4, scoped, tag = 'scoped memory for tpu_custom_call.1']
    %11 = vsyncpa [#allocation3], 0
    // Predicated region
    $region2: #{tpu_custom_call.1} parent=1 // pred_check
      _
    $region3: #{tpu_custom_call.1} parent=1 // pred_check_branch
      %13 = sbr.rel (0) target = $region5
    $region4: #{tpu_custom_call.1} parent=1 // pred_region
      _
    $region5: #{tpu_custom_call.1} parent=1 // pred_fallthru
      _
    // Predicated region
    $region6: #{tpu_custom_call.1} parent=1 // pred_check
      _
    $region7: #{tpu_custom_call.1} parent=1 // pred_check_branch
      %15 = sbr.rel (0) target = $region9
    $region8: #{tpu_custom_call.1} parent=1 // pred_region
      _
    $region9: #{tpu_custom_call.1} parent=1 // pred_fallthru
      _
    // Predicated region
    $region10: #{tpu_custom_call.1} parent=1 // pred_check
      _
    $region11: #{tpu_custom_call.1} parent=1 // pred_check_branch
      %17 = sbr.rel (0) target = $region13
    $region12: #{tpu_custom_call.1} parent=1 // pred_region
      _
    $region13: #{tpu_custom_call.1} parent=1 // pred_fallthru
      _
    // Predicated region
    $region14: #{tpu_custom_call.1} parent=1 // pred_check
      _
    $region15: #{tpu_custom_call.1} parent=1 // pred_check_branch
      %19 = sbr.rel (0) target = $region17
    $region16: #{tpu_custom_call.1} parent=1 // pred_region
      _
    $region17: #{tpu_custom_call.1} parent=1 // pred_fallthru
      _
    // Predicated region
    $region18: #{tpu_custom_call.1} parent=1 // pred_check
      _
    $region19: #{tpu_custom_call.1} parent=1 // pred_check_branch
      %21 = sbr.rel (0) target = $region21
    $region20: #{tpu_custom_call.1} parent=1 // pred_region
      _
    $region21: #{tpu_custom_call.1} parent=1 // pred_fallthru
      _
    // Predicated region
    $region22: #{tpu_custom_call.1} parent=1 // pred_check
      _
    $region23: #{tpu_custom_call.1} parent=1 // pred_check_branch
      %23 = sbr.rel (0) target = $region25
    $region24: #{tpu_custom_call.1} parent=1 // pred_region
      _
    $region25: #{tpu_custom_call.1} parent=1 // pred_fallthru
      _
    %v24 = vld [vmem:[%s0] sm:$0xff]
    %v25 = vld [vmem:[%s0 + $0x8] sm:$0xff]
    %v26 = vld [vmem:[%s1] sm:$0xff]
    %v29 = vlaneseq
    %v30 = vshrl.u32 %v29, 7
    %v31 = vsub.s32 0, %v30
    %v32 = vrot.slane %v24, %v31
    %v33 = vlaneseq
    %v34 = vshrl.u32 %v33, 7
    %v35 = vsub.s32 4, %v34
    %v36 = vrot.slane %v24, %v35
    %v37 = vlaneseq
    %v38 = vshrl.u32 %v37, 7
    %v39 = vsub.s32 0, %v38
    %v40 = vrot.slane %v25, %v39
    %v41 = vlaneseq
    %v42 = vshrl.u32 %v41, 7
    %v43 = vsub.s32 4, %v42
    %v44 = vrot.slane %v25, %v43
    %v49 = vlaneseq
    %v50 = vshrl.u32 %v49, 7
    %v51 = vsub.s32 0, %v50
    %v52 = vrot.slane %v32, %v51
    %v53 = vlaneseq
    %v54 = vshrl.u32 %v53, 7
    %v55 = vsub.s32 0, %v54
    %v56 = vrot.slane %v36, %v55
    %v57 = vlaneseq
    %v58 = vshrl.u32 %v57, 7
    %v59 = vsub.s32 0, %v58
    %v60 = vrot.slane %v40, %v59
    %v61 = vlaneseq
    %v62 = vshrl.u32 %v61, 7
    %v63 = vsub.s32 0, %v62
    %v64 = vrot.slane %v44, %v63
    %66 = vset.pattern.permute.xlu0 0
    %67 = vperm.xlu0 %66, %v26
    %v68 = vpop.permute.xlu0 %67
    %v70 = vmul.f32 %v52, %v68
    %v71 = vmul.f32 %v56, %v68
    %v72 = vmul.f32 %v60, %v68
    %v73 = vmul.f32 %v64, %v68
    %s74 = scalar_lea.vmem %s1, 8
    %v75 = vld [vmem:[%s74] sm:$0xff]
    %v76 = vlaneseq
    %v77 = vshrl.u32 %v76, 7
    %v78 = vsub.s32 1, %v77
    %v79 = vrot.slane %v24, %v78
    %v80 = vlaneseq
    %v81 = vshrl.u32 %v80, 7
    %v82 = vsub.s32 5, %v81
    %v83 = vrot.slane %v24, %v82
    %v84 = vlaneseq
    %v85 = vshrl.u32 %v84, 7
    %v86 = vsub.s32 1, %v85
    %v87 = vrot.slane %v25, %v86
    %v88 = vlaneseq
    %v89 = vshrl.u32 %v88, 7
    %v90 = vsub.s32 5, %v89
    %v91 = vrot.slane %v25, %v90
    %v96 = vlaneseq
    %v97 = vshrl.u32 %v96, 7
    %v98 = vsub.s32 1, %v97
    %v99 = vrot.slane %v79, %v98
    %v100 = vlaneseq
    %v101 = vshrl.u32 %v100, 7
    %v102 = vsub.s32 1, %v101
    %v103 = vrot.slane %v83, %v102
    %v104 = vlaneseq
    %v105 = vshrl.u32 %v104, 7
    %v106 = vsub.s32 1, %v105
    %v107 = vrot.slane %v87, %v106
    %v108 = vlaneseq
    %v109 = vshrl.u32 %v108, 7
    %v110 = vsub.s32 1, %v109
    %v111 = vrot.slane %v91, %v110
    %113 = vset.pattern.permute.xlu0 0
    %114 = vperm.xlu0 %113, %v75
    %v115 = vpop.permute.xlu0 %114
    %v117 = vmul.f32 %v99, %v115
    %v118 = vmul.f32 %v103, %v115
    %v119 = vmul.f32 %v107, %v115
    %v120 = vmul.f32 %v111, %v115
    %v121 = vadd.f32 %v70, %v117
    %v122 = vadd.f32 %v71, %v118
    %v123 = vadd.f32 %v72, %v119
    %v124 = vadd.f32 %v73, %v120
    %s125 = scalar_lea.vmem %s1, 16
    %v126 = vld [vmem:[%s125] sm:$0xff]
    %v127 = vlaneseq
    %v128 = vshrl.u32 %v127, 7
    %v129 = vsub.s32 2, %v128
    %v130 = vrot.slane %v24, %v129
    %v131 = vlaneseq
    %v132 = vshrl.u32 %v131, 7
    %v133 = vsub.s32 6, %v132
    %v134 = vrot.slane %v24, %v133
    %v135 = vlaneseq
    %v136 = vshrl.u32 %v135, 7
    %v137 = vsub.s32 2, %v136
    %v138 = vrot.slane %v25, %v137
    %v139 = vlaneseq
    %v140 = vshrl.u32 %v139, 7
    %v141 = vsub.s32 6, %v140
    %v142 = vrot.slane %v25, %v141
    %v147 = vlaneseq
    %v148 = vshrl.u32 %v147, 7
    %v149 = vsub.s32 2, %v148
    %v150 = vrot.slane %v130, %v149
    %v151 = vlaneseq
    %v152 = vshrl.u32 %v151, 7
    %v153 = vsub.s32 2, %v152
    %v154 = vrot.slane %v134, %v153
    %v155 = vlaneseq
    %v156 = vshrl.u32 %v155, 7
    %v157 = vsub.s32 2, %v156
    %v158 = vrot.slane %v138, %v157
    %v159 = vlaneseq
    %v160 = vshrl.u32 %v159, 7
    %v161 = vsub.s32 2, %v160
    %v162 = vrot.slane %v142, %v161
    %164 = vset.pattern.permute.xlu0 0
    %165 = vperm.xlu0 %164, %v126
    %v166 = vpop.permute.xlu0 %165
    %v168 = vmul.f32 %v150, %v166
    %v169 = vmul.f32 %v154, %v166
    %v170 = vmul.f32 %v158, %v166
    %v171 = vmul.f32 %v162, %v166
    %v172 = vadd.f32 %v121, %v168
    %v173 = vadd.f32 %v122, %v169
    %v174 = vadd.f32 %v123, %v170
    %v175 = vadd.f32 %v124, %v171
    %s176 = scalar_lea.vmem %s1, 24
    %v177 = vld [vmem:[%s176] sm:$0xff]
    %v178 = vlaneseq
    %v179 = vshrl.u32 %v178, 7
    %v180 = vsub.s32 3, %v179
    %v181 = vrot.slane %v24, %v180
    %v182 = vlaneseq
    %v183 = vshrl.u32 %v182, 7
    %v184 = vsub.s32 7, %v183
    %v185 = vrot.slane %v24, %v184
    %v186 = vlaneseq
    %v187 = vshrl.u32 %v186, 7
    %v188 = vsub.s32 3, %v187
    %v189 = vrot.slane %v25, %v188
    %v190 = vlaneseq
    %v191 = vshrl.u32 %v190, 7
    %v192 = vsub.s32 7, %v191
    %v193 = vrot.slane %v25, %v192
    %v198 = vlaneseq
    %v199 = vshrl.u32 %v198, 7
    %v200 = vsub.s32 3, %v199
    %v201 = vrot.slane %v181, %v200
    %v202 = vlaneseq
    %v203 = vshrl.u32 %v202, 7
    %v204 = vsub.s32 3, %v203
    %v205 = vrot.slane %v185, %v204
    %v206 = vlaneseq
    %v207 = vshrl.u32 %v206, 7
    %v208 = vsub.s32 3, %v207
    %v209 = vrot.slane %v189, %v208
    %v210 = vlaneseq
    %v211 = vshrl.u32 %v210, 7
    %v212 = vsub.s32 3, %v211
    %v213 = vrot.slane %v193, %v212
    %215 = vset.pattern.permute.xlu0 0
    %216 = vperm.xlu0 %215, %v177
    %v217 = vpop.permute.xlu0 %216
    %v219 = vmul.f32 %v201, %v217
    %v220 = vmul.f32 %v205, %v217
    %v221 = vmul.f32 %v209, %v217
    %v222 = vmul.f32 %v213, %v217
    %v223 = vadd.f32 %v172, %v219
    %v224 = vadd.f32 %v173, %v220
    %v225 = vadd.f32 %v174, %v221
    %v226 = vadd.f32 %v175, %v222
    %v227 = vld [vmem:[%s2] sm:$0xff]
    %v228 = vld [vmem:[%s2 + $0x8] sm:$0xff]
    %230 = vset.pattern.permute.xlu0 0
    %231 = vperm.xlu0 %230, %v227
    %v232 = vpop.permute.xlu0 %231
    %235 = vset.pattern.permute.xlu0 0
    %236 = vperm.xlu0 %235, %v228
    %v237 = vpop.permute.xlu0 %236
    %v239 = vmul.f32 %v223, %v232
    %v240 = vmul.f32 %v224, %v232
    %v241 = vmul.f32 %v225, %v237
    %v242 = vmul.f32 %v226, %v237
    %s243 = scalar_lea.vmem %s2, 16
    %v244 = vld [vmem:[%s243] sm:$0xff]
    %v245 = vld [vmem:[%s243 + $0x8] sm:$0xff]
    %246 = vrot.lane.b32.xlu0 %v223, 17
    %v247 = vpop.permute.xlu0 %246
    %248 = vrot.lane.b32.xlu0 %v225, 17
    %v249 = vpop.permute.xlu0 %248
    %250 = vrot.lane.b32.xlu0 %v224, 17
    %v251 = vpop.permute.xlu0 %250
    %252 = vrot.lane.b32.xlu0 %v226, 17
    %v253 = vpop.permute.xlu0 %252
    %v254 = vlaneseq
    %v255 = vand.u32 %v254, 127
    %vm256 = vcmp.lt.s32.totalorder %v255, 17
    %v257 = vsel %vm256, %v247, %v251
    %v258 = vsel %vm256, %v249, %v253
    %v259 = vsel %vm256, %v251, %v247
    %v260 = vsel %vm256, %v253, %v249
    %s261 = scalar_lea.vmem %s3, 2
    %v262 = vld [vmem:[%s261] sm:$0x3]
    %v264 = vlaneseq
    %v265 = vshrl.u32 %v264, 7
    %v266 = vsub.s32 0, %v265
    %v267 = vrot.slane %v262, %v266
    %v268 = vlaneseq
    %v269 = vshrl.u32 %v268, 7
    %v270 = vsub.s32 1, %v269
    %v271 = vrot.slane %v262, %v270
    %v274 = vmul.f32 %v259, %v267
    %v275 = vmul.f32 %v257, %v271
    %v276 = vmul.f32 %v260, %v267
    %v277 = vmul.f32 %v258, %v271
    %279 = vset.pattern.permute.xlu0 0
    %280 = vperm.xlu0 %279, %v244
    %v281 = vpop.permute.xlu0 %280
    %284 = vset.pattern.permute.xlu0 0
    %285 = vperm.xlu0 %284, %v245
    %v286 = vpop.permute.xlu0 %285
    %v288 = vmul.f32 %v274, %v281
    %v289 = vmul.f32 %v275, %v281
    %v290 = vmul.f32 %v276, %v286
    %v291 = vmul.f32 %v277, %v286
    %s292 = scalar_lea.vmem %s2, 32
    %v293 = vld [vmem:[%s292] sm:$0xff]
    %v294 = vld [vmem:[%s292 + $0x8] sm:$0xff]
    %295 = vrot.lane.b32.xlu0 %v223, 16
    %v296 = vpop.permute.xlu0 %295
    %297 = vrot.lane.b32.xlu0 %v225, 16
    %v298 = vpop.permute.xlu0 %297
    %299 = vrot.lane.b32.xlu0 %v224, 16
    %v300 = vpop.permute.xlu0 %299
    %301 = vrot.lane.b32.xlu0 %v226, 16
    %v302 = vpop.permute.xlu0 %301
    %vm303 = vcmp.lt.s32.totalorder %v255, 16
    %v304 = vsel %vm303, %v296, %v300
    %v305 = vsel %vm303, %v298, %v302
    %v306 = vsel %vm303, %v300, %v296
    %v307 = vsel %vm303, %v302, %v298
    %s308 = scalar_lea.vmem %s3, 4
    %v309 = vld [vmem:[%s308] sm:$0x3]
    %v311 = vlaneseq
    %v312 = vshrl.u32 %v311, 7
    %v313 = vsub.s32 0, %v312
    %v314 = vrot.slane %v309, %v313
    %v315 = vlaneseq
    %v316 = vshrl.u32 %v315, 7
    %v317 = vsub.s32 1, %v316
    %v318 = vrot.slane %v309, %v317
    %v321 = vmul.f32 %v306, %v314
    %v322 = vmul.f32 %v304, %v318
    %v323 = vmul.f32 %v307, %v314
    %v324 = vmul.f32 %v305, %v318
    %326 = vset.pattern.permute.xlu0 0
    %327 = vperm.xlu0 %326, %v293
    %v328 = vpop.permute.xlu0 %327
    %331 = vset.pattern.permute.xlu0 0
    %332 = vperm.xlu0 %331, %v294
    %v333 = vpop.permute.xlu0 %332
    %v335 = vmul.f32 %v321, %v328
    %v336 = vmul.f32 %v322, %v328
    %v337 = vmul.f32 %v323, %v333
    %v338 = vmul.f32 %v324, %v333
    %v339 = vadd.f32 %v239, %v335
    %v340 = vadd.f32 %v240, %v336
    %v341 = vadd.f32 %v241, %v337
    %v342 = vadd.f32 %v242, %v338
    %s343 = scalar_lea.vmem %s2, 48
    %v344 = vld [vmem:[%s343] sm:$0xff]
    %v345 = vld [vmem:[%s343 + $0x8] sm:$0xff]
    %346 = vrot.lane.b32.xlu0 %v223, 15
    %v347 = vpop.permute.xlu0 %346
    %348 = vrot.lane.b32.xlu0 %v225, 15
    %v349 = vpop.permute.xlu0 %348
    %350 = vrot.lane.b32.xlu0 %v224, 15
    %v351 = vpop.permute.xlu0 %350
    %352 = vrot.lane.b32.xlu0 %v226, 15
    %v353 = vpop.permute.xlu0 %352
    %vm354 = vcmp.lt.s32.totalorder %v255, 15
    %v355 = vsel %vm354, %v347, %v351
    %v356 = vsel %vm354, %v349, %v353
    %v357 = vsel %vm354, %v351, %v347
    %v358 = vsel %vm354, %v353, %v349
    %s359 = scalar_lea.vmem %s3, 6
    %v360 = vld [vmem:[%s359] sm:$0x3]
    %v362 = vlaneseq
    %v363 = vshrl.u32 %v362, 7
    %v364 = vsub.s32 0, %v363
    %v365 = vrot.slane %v360, %v364
    %v366 = vlaneseq
    %v367 = vshrl.u32 %v366, 7
    %v368 = vsub.s32 1, %v367
    %v369 = vrot.slane %v360, %v368
    %v372 = vmul.f32 %v357, %v365
    %v373 = vmul.f32 %v355, %v369
    %v374 = vmul.f32 %v358, %v365
    %v375 = vmul.f32 %v356, %v369
    %377 = vset.pattern.permute.xlu0 0
    %378 = vperm.xlu0 %377, %v344
    %v379 = vpop.permute.xlu0 %378
    %382 = vset.pattern.permute.xlu0 0
    %383 = vperm.xlu0 %382, %v345
    %v384 = vpop.permute.xlu0 %383
    %v386 = vmul.f32 %v372, %v379
    %v387 = vmul.f32 %v373, %v379
    %v388 = vmul.f32 %v374, %v384
    %v389 = vmul.f32 %v375, %v384
    %v390 = vadd.f32 %v288, %v386
    %v391 = vadd.f32 %v289, %v387
    %v392 = vadd.f32 %v290, %v388
    %v393 = vadd.f32 %v291, %v389
    %s394 = scalar_lea.vmem %s2, 64
    %v395 = vld [vmem:[%s394] sm:$0xff]
    %v396 = vld [vmem:[%s394 + $0x8] sm:$0xff]
    %397 = vrot.lane.b32.xlu0 %v223, 1
    %v398 = vpop.permute.xlu0 %397
    %399 = vrot.lane.b32.xlu0 %v225, 1
    %v400 = vpop.permute.xlu0 %399
    %401 = vrot.lane.b32.xlu0 %v224, 1
    %v402 = vpop.permute.xlu0 %401
    %403 = vrot.lane.b32.xlu0 %v226, 1
    %v404 = vpop.permute.xlu0 %403
    %vm405 = vcmp.lt.s32.totalorder %v255, 1
    %v406 = vsel %vm405, %v398, %v402
    %v407 = vsel %vm405, %v400, %v404
    %v408 = vsel %vm405, %v402, %v398
    %v409 = vsel %vm405, %v404, %v400
    %s410 = scalar_lea.vmem %s3, 8
    %v411 = vld [vmem:[%s410] sm:$0x3]
    %v413 = vlaneseq
    %v414 = vshrl.u32 %v413, 7
    %v415 = vsub.s32 0, %v414
    %v416 = vrot.slane %v411, %v415
    %v417 = vlaneseq
    %v418 = vshrl.u32 %v417, 7
    %v419 = vsub.s32 1, %v418
    %v420 = vrot.slane %v411, %v419
    %v423 = vmul.f32 %v408, %v416
    %v424 = vmul.f32 %v406, %v420
    %v425 = vmul.f32 %v409, %v416
    %v426 = vmul.f32 %v407, %v420
    %428 = vset.pattern.permute.xlu0 0
    %429 = vperm.xlu0 %428, %v395
    %v430 = vpop.permute.xlu0 %429
    %433 = vset.pattern.permute.xlu0 0
    %434 = vperm.xlu0 %433, %v396
    %v435 = vpop.permute.xlu0 %434
    %v437 = vmul.f32 %v423, %v430
    %v438 = vmul.f32 %v424, %v430
    %v439 = vmul.f32 %v425, %v435
    %v440 = vmul.f32 %v426, %v435
    %v441 = vadd.f32 %v339, %v437
    %v442 = vadd.f32 %v340, %v438
    %v443 = vadd.f32 %v341, %v439
    %v444 = vadd.f32 %v342, %v440
    %s445 = scalar_lea.vmem %s2, 80
    %v446 = vld [vmem:[%s445] sm:$0xff]
    %v447 = vld [vmem:[%s445 + $0x8] sm:$0xff]
    %448 = vrot.lane.b32.xlu0 %v223, 127
    %v449 = vpop.permute.xlu0 %448
    %450 = vrot.lane.b32.xlu0 %v225, 127
    %v451 = vpop.permute.xlu0 %450
    %452 = vrot.lane.b32.xlu0 %v224, 127
    %v453 = vpop.permute.xlu0 %452
    %454 = vrot.lane.b32.xlu0 %v226, 127
    %v455 = vpop.permute.xlu0 %454
    %vm456 = vcmp.lt.s32.totalorder %v255, 127
    %v457 = vsel %vm456, %v449, %v453
    %v458 = vsel %vm456, %v451, %v455
    %v459 = vsel %vm456, %v453, %v449
    %v460 = vsel %vm456, %v455, %v451
    %s461 = scalar_lea.vmem %s3, 10
    %v462 = vld [vmem:[%s461] sm:$0x3]
    %v464 = vlaneseq
    %v465 = vshrl.u32 %v464, 7
    %v466 = vsub.s32 0, %v465
    %v467 = vrot.slane %v462, %v466
    %v468 = vlaneseq
    %v469 = vshrl.u32 %v468, 7
    %v470 = vsub.s32 1, %v469
    %v471 = vrot.slane %v462, %v470
    %v474 = vmul.f32 %v457, %v467
    %v475 = vmul.f32 %v459, %v471
    %v476 = vmul.f32 %v458, %v467
    %v477 = vmul.f32 %v460, %v471
    %479 = vset.pattern.permute.xlu0 0
    %480 = vperm.xlu0 %479, %v446
    %v481 = vpop.permute.xlu0 %480
    %484 = vset.pattern.permute.xlu0 0
    %485 = vperm.xlu0 %484, %v447
    %v486 = vpop.permute.xlu0 %485
    %v488 = vmul.f32 %v474, %v481
    %v489 = vmul.f32 %v475, %v481
    %v490 = vmul.f32 %v476, %v486
    %v491 = vmul.f32 %v477, %v486
    %v492 = vadd.f32 %v390, %v488
    %v493 = vadd.f32 %v391, %v489
    %v494 = vadd.f32 %v392, %v490
    %v495 = vadd.f32 %v393, %v491
    %s496 = scalar_lea.vmem %s2, 96
    %v497 = vld [vmem:[%s496] sm:$0xff]
    %v498 = vld [vmem:[%s496 + $0x8] sm:$0xff]
    %499 = vrot.lane.b32.xlu0 %v223, 113
    %v500 = vpop.permute.xlu0 %499
    %501 = vrot.lane.b32.xlu0 %v225, 113
    %v502 = vpop.permute.xlu0 %501
    %503 = vrot.lane.b32.xlu0 %v224, 113
    %v504 = vpop.permute.xlu0 %503
    %505 = vrot.lane.b32.xlu0 %v226, 113
    %v506 = vpop.permute.xlu0 %505
    %vm507 = vcmp.lt.s32.totalorder %v255, 113
    %v508 = vsel %vm507, %v500, %v504
    %v509 = vsel %vm507, %v502, %v506
    %v510 = vsel %vm507, %v504, %v500
    %v511 = vsel %vm507, %v506, %v502
    %s512 = scalar_lea.vmem %s3, 12
    %v513 = vld [vmem:[%s512] sm:$0x3]
    %v515 = vlaneseq
    %v516 = vshrl.u32 %v515, 7
    %v517 = vsub.s32 0, %v516
    %v518 = vrot.slane %v513, %v517
    %v519 = vlaneseq
    %v520 = vshrl.u32 %v519, 7
    %v521 = vsub.s32 1, %v520
    %v522 = vrot.slane %v513, %v521
    %v525 = vmul.f32 %v508, %v518
    %v526 = vmul.f32 %v510, %v522
    %v527 = vmul.f32 %v509, %v518
    %v528 = vmul.f32 %v511, %v522
    %530 = vset.pattern.permute.xlu0 0
    %531 = vperm.xlu0 %530, %v497
    %v532 = vpop.permute.xlu0 %531
    %535 = vset.pattern.permute.xlu0 0
    %536 = vperm.xlu0 %535, %v498
    %v537 = vpop.permute.xlu0 %536
    %v539 = vmul.f32 %v525, %v532
    %v540 = vmul.f32 %v526, %v532
    %v541 = vmul.f32 %v527, %v537
    %v542 = vmul.f32 %v528, %v537
    %v543 = vadd.f32 %v441, %v539
    %v544 = vadd.f32 %v442, %v540
    %v545 = vadd.f32 %v443, %v541
    %v546 = vadd.f32 %v444, %v542
    %s547 = scalar_lea.vmem %s2, 112
    %v548 = vld [vmem:[%s547] sm:$0xff]
    %v549 = vld [vmem:[%s547 + $0x8] sm:$0xff]
    %550 = vrot.lane.b32.xlu0 %v223, 112
    %v551 = vpop.permute.xlu0 %550
    %552 = vrot.lane.b32.xlu0 %v225, 112
    %v553 = vpop.permute.xlu0 %552
    %554 = vrot.lane.b32.xlu0 %v224, 112
    %v555 = vpop.permute.xlu0 %554
    %556 = vrot.lane.b32.xlu0 %v226, 112
    %v557 = vpop.permute.xlu0 %556
    %vm558 = vcmp.lt.s32.totalorder %v255, 112
    %v559 = vsel %vm558, %v551, %v555
    %v560 = vsel %vm558, %v553, %v557
    %v561 = vsel %vm558, %v555, %v551
    %v562 = vsel %vm558, %v557, %v553
    %s563 = scalar_lea.vmem %s3, 14
    %v564 = vld [vmem:[%s563] sm:$0x3]
    %v566 = vlaneseq
    %v567 = vshrl.u32 %v566, 7
    %v568 = vsub.s32 0, %v567
    %v569 = vrot.slane %v564, %v568
    %v570 = vlaneseq
    %v571 = vshrl.u32 %v570, 7
    %v572 = vsub.s32 1, %v571
    %v573 = vrot.slane %v564, %v572
    %v576 = vmul.f32 %v559, %v569
    %v577 = vmul.f32 %v561, %v573
    %v578 = vmul.f32 %v560, %v569
    %v579 = vmul.f32 %v562, %v573
    %581 = vset.pattern.permute.xlu0 0
    %582 = vperm.xlu0 %581, %v548
    %v583 = vpop.permute.xlu0 %582
    %586 = vset.pattern.permute.xlu0 0
    %587 = vperm.xlu0 %586, %v549
    %v588 = vpop.permute.xlu0 %587
    %v590 = vmul.f32 %v576, %v583
    %v591 = vmul.f32 %v577, %v583
    %v592 = vmul.f32 %v578, %v588
    %v593 = vmul.f32 %v579, %v588
    %v594 = vadd.f32 %v492, %v590
    %v595 = vadd.f32 %v493, %v591
    %v596 = vadd.f32 %v494, %v592
    %v597 = vadd.f32 %v495, %v593
    %s598 = scalar_lea.vmem %s2, 128
    %v599 = vld [vmem:[%s598] sm:$0xff]
    %v600 = vld [vmem:[%s598 + $0x8] sm:$0xff]
    %601 = vrot.lane.b32.xlu0 %v223, 111
    %v602 = vpop.permute.xlu0 %601
    %603 = vrot.lane.b32.xlu0 %v225, 111
    %v604 = vpop.permute.xlu0 %603
    %605 = vrot.lane.b32.xlu0 %v224, 111
    %v606 = vpop.permute.xlu0 %605
    %607 = vrot.lane.b32.xlu0 %v226, 111
    %v608 = vpop.permute.xlu0 %607
    %vm609 = vcmp.lt.s32.totalorder %v255, 111
    %v610 = vsel %vm609, %v602, %v606
    %v611 = vsel %vm609, %v604, %v608
    %v612 = vsel %vm609, %v606, %v602
    %v613 = vsel %vm609, %v608, %v604
    %s614 = scalar_lea.vmem %s3, 16
    %v615 = vld [vmem:[%s614] sm:$0x3]
    %v617 = vlaneseq
    %v618 = vshrl.u32 %v617, 7
    %v619 = vsub.s32 0, %v618
    %v620 = vrot.slane %v615, %v619
    %v621 = vlaneseq
    %v622 = vshrl.u32 %v621, 7
    %v623 = vsub.s32 1, %v622
    %v624 = vrot.slane %v615, %v623
    %v627 = vmul.f32 %v610, %v620
    %v628 = vmul.f32 %v612, %v624
    %v629 = vmul.f32 %v611, %v620
    %v630 = vmul.f32 %v613, %v624
    %632 = vset.pattern.permute.xlu0 0
    %633 = vperm.xlu0 %632, %v599
    %v634 = vpop.permute.xlu0 %633
    %637 = vset.pattern.permute.xlu0 0
    %638 = vperm.xlu0 %637, %v600
    %v639 = vpop.permute.xlu0 %638
    %v641 = vmul.f32 %v627, %v634
    %v642 = vmul.f32 %v628, %v634
    %v643 = vmul.f32 %v629, %v639
    %v644 = vmul.f32 %v630, %v639
    %v645 = vadd.f32 %v543, %v641
    %v646 = vadd.f32 %v544, %v642
    %v647 = vadd.f32 %v545, %v643
    %v648 = vadd.f32 %v546, %v644
    %s649 = scalar_lea.vmem %s2, 144
    %v650 = vld [vmem:[%s649] sm:$0xff]
    %v651 = vld [vmem:[%s649 + $0x8] sm:$0xff]
    %652 = vrot.lane.b32.xlu0 %v223, 34
    %v653 = vpop.permute.xlu0 %652
    %654 = vrot.lane.b32.xlu0 %v225, 34
    %v655 = vpop.permute.xlu0 %654
    %656 = vrot.lane.b32.xlu0 %v224, 34
    %v657 = vpop.permute.xlu0 %656
    %658 = vrot.lane.b32.xlu0 %v226, 34
    %v659 = vpop.permute.xlu0 %658
    %vm660 = vcmp.lt.s32.totalorder %v255, 34
    %v661 = vsel %vm660, %v653, %v657
    %v662 = vsel %vm660, %v655, %v659
    %v663 = vsel %vm660, %v657, %v653
    %v664 = vsel %vm660, %v659, %v655
    %s665 = scalar_lea.vmem %s3, 18
    %v666 = vld [vmem:[%s665] sm:$0x3]
    %v668 = vlaneseq
    %v669 = vshrl.u32 %v668, 7
    %v670 = vsub.s32 0, %v669
    %v671 = vrot.slane %v666, %v670
    %v672 = vlaneseq
    %v673 = vshrl.u32 %v672, 7
    %v674 = vsub.s32 1, %v673
    %v675 = vrot.slane %v666, %v674
    %v678 = vmul.f32 %v663, %v671
    %v679 = vmul.f32 %v661, %v675
    %v680 = vmul.f32 %v664, %v671
    %v681 = vmul.f32 %v662, %v675
    %683 = vset.pattern.permute.xlu0 0
    %684 = vperm.xlu0 %683, %v650
    %v685 = vpop.permute.xlu0 %684
    %688 = vset.pattern.permute.xlu0 0
    %689 = vperm.xlu0 %688, %v651
    %v690 = vpop.permute.xlu0 %689
    %v692 = vmul.f32 %v678, %v685
    %v693 = vmul.f32 %v679, %v685
    %v694 = vmul.f32 %v680, %v690
    %v695 = vmul.f32 %v681, %v690
    %v696 = vadd.f32 %v594, %v692
    %v697 = vadd.f32 %v595, %v693
    %v698 = vadd.f32 %v596, %v694
    %v699 = vadd.f32 %v597, %v695
    %s700 = scalar_lea.vmem %s2, 160
    %v701 = vld [vmem:[%s700] sm:$0xff]
    %v702 = vld [vmem:[%s700 + $0x8] sm:$0xff]
    %703 = vrot.lane.b32.xlu0 %v223, 32
    %v704 = vpop.permute.xlu0 %703
    %705 = vrot.lane.b32.xlu0 %v225, 32
    %v706 = vpop.permute.xlu0 %705
    %707 = vrot.lane.b32.xlu0 %v224, 32
    %v708 = vpop.permute.xlu0 %707
    %709 = vrot.lane.b32.xlu0 %v226, 32
    %v710 = vpop.permute.xlu0 %709
    %vm711 = vcmp.lt.s32.totalorder %v255, 32
    %v712 = vsel %vm711, %v704, %v708
    %v713 = vsel %vm711, %v706, %v710
    %v714 = vsel %vm711, %v708, %v704
    %v715 = vsel %vm711, %v710, %v706
    %s716 = scalar_lea.vmem %s3, 20
    %v717 = vld [vmem:[%s716] sm:$0x3]
    %v719 = vlaneseq
    %v720 = vshrl.u32 %v719, 7
    %v721 = vsub.s32 0, %v720
    %v722 = vrot.slane %v717, %v721
    %v723 = vlaneseq
    %v724 = vshrl.u32 %v723, 7
    %v725 = vsub.s32 1, %v724
    %v726 = vrot.slane %v717, %v725
    %v729 = vmul.f32 %v714, %v722
    %v730 = vmul.f32 %v712, %v726
    %v731 = vmul.f32 %v715, %v722
    %v732 = vmul.f32 %v713, %v726
    %734 = vset.pattern.permute.xlu0 0
    %735 = vperm.xlu0 %734, %v701
    %v736 = vpop.permute.xlu0 %735
    %739 = vset.pattern.permute.xlu0 0
    %740 = vperm.xlu0 %739, %v702
    %v741 = vpop.permute.xlu0 %740
    %v743 = vmul.f32 %v729, %v736
    %v744 = vmul.f32 %v730, %v736
    %v745 = vmul.f32 %v731, %v741
    %v746 = vmul.f32 %v732, %v741
    %v747 = vadd.f32 %v645, %v743
    %v748 = vadd.f32 %v646, %v744
    %v749 = vadd.f32 %v647, %v745
    %v750 = vadd.f32 %v648, %v746
    %s751 = scalar_lea.vmem %s2, 176
    %v752 = vld [vmem:[%s751] sm:$0xff]
    %v753 = vld [vmem:[%s751 + $0x8] sm:$0xff]
    %754 = vrot.lane.b32.xlu0 %v223, 30
    %v755 = vpop.permute.xlu0 %754
    %756 = vrot.lane.b32.xlu0 %v225, 30
    %v757 = vpop.permute.xlu0 %756
    %758 = vrot.lane.b32.xlu0 %v224, 30
    %v759 = vpop.permute.xlu0 %758
    %760 = vrot.lane.b32.xlu0 %v226, 30
    %v761 = vpop.permute.xlu0 %760
    %vm762 = vcmp.lt.s32.totalorder %v255, 30
    %v763 = vsel %vm762, %v755, %v759
    %v764 = vsel %vm762, %v757, %v761
    %v765 = vsel %vm762, %v759, %v755
    %v766 = vsel %vm762, %v761, %v757
    %s767 = scalar_lea.vmem %s3, 22
    %v768 = vld [vmem:[%s767] sm:$0x3]
    %v770 = vlaneseq
    %v771 = vshrl.u32 %v770, 7
    %v772 = vsub.s32 0, %v771
    %v773 = vrot.slane %v768, %v772
    %v774 = vlaneseq
    %v775 = vshrl.u32 %v774, 7
    %v776 = vsub.s32 1, %v775
    %v777 = vrot.slane %v768, %v776
    %v780 = vmul.f32 %v765, %v773
    %v781 = vmul.f32 %v763, %v777
    %v782 = vmul.f32 %v766, %v773
    %v783 = vmul.f32 %v764, %v777
    %785 = vset.pattern.permute.xlu0 0
    %786 = vperm.xlu0 %785, %v752
    %v787 = vpop.permute.xlu0 %786
    %790 = vset.pattern.permute.xlu0 0
    %791 = vperm.xlu0 %790, %v753
    %v792 = vpop.permute.xlu0 %791
    %v794 = vmul.f32 %v780, %v787
    %v795 = vmul.f32 %v781, %v787
    %v796 = vmul.f32 %v782, %v792
    %v797 = vmul.f32 %v783, %v792
    %v798 = vadd.f32 %v696, %v794
    %v799 = vadd.f32 %v697, %v795
    %v800 = vadd.f32 %v698, %v796
    %v801 = vadd.f32 %v699, %v797
    %s802 = scalar_lea.vmem %s2, 192
    %v803 = vld [vmem:[%s802] sm:$0xff]
    %v804 = vld [vmem:[%s802 + $0x8] sm:$0xff]
    %805 = vrot.lane.b32.xlu0 %v223, 2
    %v806 = vpop.permute.xlu0 %805
    %807 = vrot.lane.b32.xlu0 %v225, 2
    %v808 = vpop.permute.xlu0 %807
    %809 = vrot.lane.b32.xlu0 %v224, 2
    %v810 = vpop.permute.xlu0 %809
    %811 = vrot.lane.b32.xlu0 %v226, 2
    %v812 = vpop.permute.xlu0 %811
    %vm813 = vcmp.lt.s32.totalorder %v255, 2
    %v814 = vsel %vm813, %v806, %v810
    %v815 = vsel %vm813, %v808, %v812
    %v816 = vsel %vm813, %v810, %v806
    %v817 = vsel %vm813, %v812, %v808
    %s818 = scalar_lea.vmem %s3, 24
    %v819 = vld [vmem:[%s818] sm:$0x3]
    %v821 = vlaneseq
    %v822 = vshrl.u32 %v821, 7
    %v823 = vsub.s32 0, %v822
    %v824 = vrot.slane %v819, %v823
    %v825 = vlaneseq
    %v826 = vshrl.u32 %v825, 7
    %v827 = vsub.s32 1, %v826
    %v828 = vrot.slane %v819, %v827
    %v831 = vmul.f32 %v816, %v824
    %v832 = vmul.f32 %v814, %v828
    %v833 = vmul.f32 %v817, %v824
    %v834 = vmul.f32 %v815, %v828
    %836 = vset.pattern.permute.xlu0 0
    %837 = vperm.xlu0 %836, %v803
    %v838 = vpop.permute.xlu0 %837
    %841 = vset.pattern.permute.xlu0 0
    %842 = vperm.xlu0 %841, %v804
    %v843 = vpop.permute.xlu0 %842
    %v845 = vmul.f32 %v831, %v838
    %v846 = vmul.f32 %v832, %v838
    %v847 = vmul.f32 %v833, %v843
    %v848 = vmul.f32 %v834, %v843
    %v849 = vadd.f32 %v747, %v845
    %v850 = vadd.f32 %v748, %v846
    %v851 = vadd.f32 %v749, %v847
    %v852 = vadd.f32 %v750, %v848
    %s853 = scalar_lea.vmem %s2, 208
    %v854 = vld [vmem:[%s853] sm:$0xff]
    %v855 = vld [vmem:[%s853 + $0x8] sm:$0xff]
    %856 = vrot.lane.b32.xlu0 %v223, 126
    %v857 = vpop.permute.xlu0 %856
    %858 = vrot.lane.b32.xlu0 %v225, 126
    %v859 = vpop.permute.xlu0 %858
    %860 = vrot.lane.b32.xlu0 %v224, 126
    %v861 = vpop.permute.xlu0 %860
    %862 = vrot.lane.b32.xlu0 %v226, 126
    %v863 = vpop.permute.xlu0 %862
    %vm864 = vcmp.lt.s32.totalorder %v255, 126
    %v865 = vsel %vm864, %v857, %v861
    %v866 = vsel %vm864, %v859, %v863
    %v867 = vsel %vm864, %v861, %v857
    %v868 = vsel %vm864, %v863, %v859
    %s869 = scalar_lea.vmem %s3, 26
    %v870 = vld [vmem:[%s869] sm:$0x3]
    %v872 = vlaneseq
    %v873 = vshrl.u32 %v872, 7
    %v874 = vsub.s32 0, %v873
    %v875 = vrot.slane %v870, %v874
    %v876 = vlaneseq
    %v877 = vshrl.u32 %v876, 7
    %v878 = vsub.s32 1, %v877
    %v879 = vrot.slane %v870, %v878
    %v882 = vmul.f32 %v865, %v875
    %v883 = vmul.f32 %v867, %v879
    %v884 = vmul.f32 %v866, %v875
    %v885 = vmul.f32 %v868, %v879
    %887 = vset.pattern.permute.xlu0 0
    %888 = vperm.xlu0 %887, %v854
    %v889 = vpop.permute.xlu0 %888
    %892 = vset.pattern.permute.xlu0 0
    %893 = vperm.xlu0 %892, %v855
    %v894 = vpop.permute.xlu0 %893
    %v896 = vmul.f32 %v882, %v889
    %v897 = vmul.f32 %v883, %v889
    %v898 = vmul.f32 %v884, %v894
    %v899 = vmul.f32 %v885, %v894
    %v900 = vadd.f32 %v798, %v896
    %v901 = vadd.f32 %v799, %v897
    %v902 = vadd.f32 %v800, %v898
    %v903 = vadd.f32 %v801, %v899
    %s904 = scalar_lea.vmem %s2, 224
    %v905 = vld [vmem:[%s904] sm:$0xff]
    %v906 = vld [vmem:[%s904 + $0x8] sm:$0xff]
    %907 = vrot.lane.b32.xlu0 %v223, 98
    %v908 = vpop.permute.xlu0 %907
    %909 = vrot.lane.b32.xlu0 %v225, 98
    %v910 = vpop.permute.xlu0 %909
    %911 = vrot.lane.b32.xlu0 %v224, 98
    %v912 = vpop.permute.xlu0 %911
    %913 = vrot.lane.b32.xlu0 %v226, 98
    %v914 = vpop.permute.xlu0 %913
    %vm915 = vcmp.lt.s32.totalorder %v255, 98
    %v916 = vsel %vm915, %v908, %v912
    %v917 = vsel %vm915, %v910, %v914
    %v918 = vsel %vm915, %v912, %v908
    %v919 = vsel %vm915, %v914, %v910
    %s920 = scalar_lea.vmem %s3, 28
    %v921 = vld [vmem:[%s920] sm:$0x3]
    %v923 = vlaneseq
    %v924 = vshrl.u32 %v923, 7
    %v925 = vsub.s32 0, %v924
    %v926 = vrot.slane %v921, %v925
    %v927 = vlaneseq
    %v928 = vshrl.u32 %v927, 7
    %v929 = vsub.s32 1, %v928
    %v930 = vrot.slane %v921, %v929
    %v933 = vmul.f32 %v916, %v926
    %v934 = vmul.f32 %v918, %v930
    %v935 = vmul.f32 %v917, %v926
    %v936 = vmul.f32 %v919, %v930
    %938 = vset.pattern.permute.xlu0 0
    %939 = vperm.xlu0 %938, %v905
    %v940 = vpop.permute.xlu0 %939
    %943 = vset.pattern.permute.xlu0 0
    %944 = vperm.xlu0 %943, %v906
    %v945 = vpop.permute.xlu0 %944
    %v947 = vmul.f32 %v933, %v940
    %v948 = vmul.f32 %v934, %v940
    %v949 = vmul.f32 %v935, %v945
    %v950 = vmul.f32 %v936, %v945
    %v951 = vadd.f32 %v849, %v947
    %v952 = vadd.f32 %v850, %v948
    %v953 = vadd.f32 %v851, %v949
    %v954 = vadd.f32 %v852, %v950
    %s955 = scalar_lea.vmem %s2, 240
    %v956 = vld [vmem:[%s955] sm:$0xff]
    %v957 = vld [vmem:[%s955 + $0x8] sm:$0xff]
    %958 = vrot.lane.b32.xlu0 %v223, 96
    %v959 = vpop.permute.xlu0 %958
    %960 = vrot.lane.b32.xlu0 %v225, 96
    %v961 = vpop.permute.xlu0 %960
    %962 = vrot.lane.b32.xlu0 %v224, 96
    %v963 = vpop.permute.xlu0 %962
    %964 = vrot.lane.b32.xlu0 %v226, 96
    %v965 = vpop.permute.xlu0 %964
    %vm966 = vcmp.lt.s32.totalorder %v255, 96
    %v967 = vsel %vm966, %v959, %v963
    %v968 = vsel %vm966, %v961, %v965
    %v969 = vsel %vm966, %v963, %v959
    %v970 = vsel %vm966, %v965, %v961
    %s971 = scalar_lea.vmem %s3, 30
    %v972 = vld [vmem:[%s971] sm:$0x3]
    %v974 = vlaneseq
    %v975 = vshrl.u32 %v974, 7
    %v976 = vsub.s32 0, %v975
    %v977 = vrot.slane %v972, %v976
    %v978 = vlaneseq
    %v979 = vshrl.u32 %v978, 7
    %v980 = vsub.s32 1, %v979
    %v981 = vrot.slane %v972, %v980
    %v984 = vmul.f32 %v967, %v977
    %v985 = vmul.f32 %v969, %v981
    %v986 = vmul.f32 %v968, %v977
    %v987 = vmul.f32 %v970, %v981
    %989 = vset.pattern.permute.xlu0 0
    %990 = vperm.xlu0 %989, %v956
    %v991 = vpop.permute.xlu0 %990
    %994 = vset.pattern.permute.xlu0 0
    %995 = vperm.xlu0 %994, %v957
    %v996 = vpop.permute.xlu0 %995
    %v998 = vmul.f32 %v984, %v991
    %v999 = vmul.f32 %v985, %v991
    %v1000 = vmul.f32 %v986, %v996
    %v1001 = vmul.f32 %v987, %v996
    %v1002 = vadd.f32 %v900, %v998
    %v1003 = vadd.f32 %v901, %v999
    %v1004 = vadd.f32 %v902, %v1000
    %v1005 = vadd.f32 %v903, %v1001
    %s1006 = scalar_lea.vmem %s2, 256
    %v1007 = vld [vmem:[%s1006] sm:$0xff]
    %v1008 = vld [vmem:[%s1006 + $0x8] sm:$0xff]
    %1009 = vrot.lane.b32.xlu0 %v223, 94
    %v1010 = vpop.permute.xlu0 %1009
    %1011 = vrot.lane.b32.xlu0 %v225, 94
    %v1012 = vpop.permute.xlu0 %1011
    %1013 = vrot.lane.b32.xlu0 %v224, 94
    %v1014 = vpop.permute.xlu0 %1013
    %1015 = vrot.lane.b32.xlu0 %v226, 94
    %v1016 = vpop.permute.xlu0 %1015
    %vm1017 = vcmp.lt.s32.totalorder %v255, 94
    %v1018 = vsel %vm1017, %v1010, %v1014
    %v1019 = vsel %vm1017, %v1012, %v1016
    %v1020 = vsel %vm1017, %v1014, %v1010
    %v1021 = vsel %vm1017, %v1016, %v1012
    %s1022 = scalar_lea.vmem %s3, 32
    %v1023 = vld [vmem:[%s1022] sm:$0x3]
    %v1025 = vlaneseq
    %v1026 = vshrl.u32 %v1025, 7
    %v1027 = vsub.s32 0, %v1026
    %v1028 = vrot.slane %v1023, %v1027
    %v1029 = vlaneseq
    %v1030 = vshrl.u32 %v1029, 7
    %v1031 = vsub.s32 1, %v1030
    %v1032 = vrot.slane %v1023, %v1031
    %v1035 = vmul.f32 %v1018, %v1028
    %v1036 = vmul.f32 %v1020, %v1032
    %v1037 = vmul.f32 %v1019, %v1028
    %v1038 = vmul.f32 %v1021, %v1032
    %1040 = vset.pattern.permute.xlu0 0
    %1041 = vperm.xlu0 %1040, %v1007
    %v1042 = vpop.permute.xlu0 %1041
    %1045 = vset.pattern.permute.xlu0 0
    %1046 = vperm.xlu0 %1045, %v1008
    %v1047 = vpop.permute.xlu0 %1046
    %v1049 = vmul.f32 %v1035, %v1042
    %v1050 = vmul.f32 %v1036, %v1042
    %v1051 = vmul.f32 %v1037, %v1047
    %v1052 = vmul.f32 %v1038, %v1047
    %v1053 = vadd.f32 %v951, %v1049
    %v1054 = vadd.f32 %v952, %v1050
    %v1055 = vadd.f32 %v953, %v1051
    %v1056 = vadd.f32 %v954, %v1052
    %v1057 = vadd.f32 %v1053, %v1002
    %v1058 = vadd.f32 %v1054, %v1003
    %v1059 = vadd.f32 %v1055, %v1004
    %v1060 = vadd.f32 %v1056, %v1005
    %v1061 = vadd.f32 %v1057, %v1058
    %1062 = vadd.xlane.f32.xlu0 %v1061
    %v1063 = vpop.xlane.xlu0 %1062
    %v1064 = vadd.f32 %v1059, %v1060
    %1065 = vadd.xlane.f32.xlu0 %v1064
    %v1066 = vpop.xlane.xlu0 %1065
    %v1067 = vadd.f32 %v1063, %v1066
    %v1068 = vrcp.pop 512.0
    %v1069 = vmul.f32 %v1067, %v1068
    %v1070 = vsub.f32 %v1057, %v1069
    %v1071 = vsub.f32 %v1058, %v1069
    %v1072 = vsub.f32 %v1059, %v1069
    %v1073 = vsub.f32 %v1060, %v1069
    %v1074 = vmul.f32 %v1070, %v1070
    %v1075 = vmul.f32 %v1071, %v1071
    %v1076 = vmul.f32 %v1072, %v1072
    %v1077 = vmul.f32 %v1073, %v1073
    %v1078 = vadd.f32 %v1074, %v1075
    %1079 = vadd.xlane.f32.xlu0 %v1078
    %v1080 = vpop.xlane.xlu0 %1079
    %v1081 = vadd.f32 %v1076, %v1077
    %1082 = vadd.xlane.f32.xlu0 %v1081
    %v1083 = vpop.xlane.xlu0 %1082
    %v1084 = vadd.f32 %v1080, %v1083
    %v1085 = vmul.f32 %v1084, %v1068
    %v1086 = vld [vmem:[%s4] sm:$0xff]
    %v1087 = vadd.f32 %v1085, 1e-05
    %v1088 = vrsqrt.pop %v1087
    %v1089 = vmul.f32 %v1086, %v1088
    %1091 = vset.pattern.permute.xlu0 0
    %1092 = vperm.xlu0 %1091, %v1089
    %v1093 = vpop.permute.xlu0 %1092
    %v1095 = vmul.f32 %v1070, %v1093
    %v1096 = vmul.f32 %v1071, %v1093
    %v1097 = vmul.f32 %v1072, %v1093
    %v1098 = vmul.f32 %v1073, %v1093
    %v1099 = vld [vmem:[%s5] sm:$0xff]
    %1101 = vset.pattern.permute.xlu0 0
    %1102 = vperm.xlu0 %1101, %v1099
    %v1103 = vpop.permute.xlu0 %1102
    %v1105 = vadd.f32 %v1095, %v1103
    %v1106 = vadd.f32 %v1096, %v1103
    %v1107 = vadd.f32 %v1097, %v1103
    %v1108 = vadd.f32 %v1098, %v1103
    %1109 = vst [vmem:[#allocation2] sm:$0xff] %v1105
    %1110 = vst [vmem:[#allocation2 + $0x8] sm:$0xff] %v1106
    %1111 = vst [vmem:[#allocation2 + $0x10] sm:$0xff] %v1107
    %1112 = vst [vmem:[#allocation2 + $0x18] sm:$0xff] %v1108
    // Predicated region
    $region26: #{tpu_custom_call.1} parent=1 // pred_check
      _
    $region27: #{tpu_custom_call.1} parent=1 // pred_check_branch
      %1114 = sbr.rel (0) target = $region29
    $region28: #{tpu_custom_call.1} parent=1 // pred_region
      %s1116 = ssub.s32 512, 512
      %1117 = vsyncadd [#allocation3], %s1116
      %s1118 = sshll.u32 [#allocation2], 4
      %s1119 = int_to_ptr.vmem [resolvable:$true] %s1118
      %1124 = dma.vmem_to_hbm [thread:$0]  %s1119, 512, %s6, [#allocation3], 256, 256, 16
    $region29: #{tpu_custom_call.1} parent=1 // pred_fallthru
      _
    // Predicated region
    $region30: #{tpu_custom_call.1} parent=1 // pred_check
      _
    $region31: #{tpu_custom_call.1} parent=1 // pred_check_branch
      %1126 = sbr.rel (0) target = $region33
    $region32: #{tpu_custom_call.1} parent=1 // pred_region
      %1127 = dma.done [#allocation3], 512
    $region33: #{tpu_custom_call.1} parent=1 // pred_fallthru
      _
    %1128 = vsyncpa [#allocation3], 1

</llo_original>
